<compile_context>
chip_gen: v7x
topology: tpu7x:2x2x1
jax: 0.10.0
libtpu: 0.0.40
codegen_flags: <defaults>
</compile_context>

<pallas_src>
import functools

import jax
import jax.numpy as jnp
from jax.experimental import pallas as pl
from jax.experimental.pallas import tpu as pltpu

HIDDEN = 256  # fixed by the module: nn.Linear(dim, 256)


def _round_up(x, m):
    return ((x + m - 1) // m) * m


# -----------------------------------------------------------------------------
# Kernel: one (batch tile) x (label tile) grid step.
#   label step j == 0 : h = relu(x @ W1 + b1) -> VMEM scratch (f32), reused afterwards
#   every label step  : o = h @ W2[:, tile_j] + b2[tile_j]
# -----------------------------------------------------------------------------
def _mlp_kernel(x_ref, w1_ref, b1_ref, w2_ref, b2_ref, o_ref, h_ref):
    @pl.when(pl.program_id(1) == 0)
    def _compute_hidden():
        xb = x_ref[...].astype(w1_ref.dtype)                    # cast to MXU dtype (VPU)
        h = jnp.dot(xb, w1_ref[...], preferred_element_type=jnp.float32)
        h_ref[...] = jnp.maximum(h + b1_ref[...], 0.0)          # bias + ReLU in f32

    h = h_ref[...].astype(w2_ref.dtype)
    o = jnp.dot(h, w2_ref[...], preferred_element_type=jnp.float32)
    o_ref[...] = (o + b2_ref[...]).astype(o_ref.dtype)


# -----------------------------------------------------------------------------
# One-time parameter preparation (hoisted out of the per-call path).
# -----------------------------------------------------------------------------
def prepare_classifier_params(w1, b1, w2, b2, compute_dtype=jnp.bfloat16):
    """w1: (256, dim), b1: (256,), w2: (num_labels, 256), b2: (num_labels,)."""
    H, D = w1.shape
    L = w2.shape[0]
    assert H == HIDDEN and w2.shape[1] == HIDDEN

    Dp = _round_up(D, 128)
    # Label tile: whole (padded) label axis when small, else 512-wide tiles.
    tn = _round_up(L, 128) if L <= 2048 else 512
    Lp = _round_up(L, tn)

    w1t = jnp.pad(jnp.transpose(w1), ((0, Dp - D), (0, 0))).astype(compute_dtype)  # (Dp, H)
    w2t = jnp.pad(jnp.transpose(w2), ((0, 0), (0, Lp - L))).astype(compute_dtype)  # (H, Lp)
    b1r = jnp.reshape(b1, (1, H)).astype(jnp.float32)
    b2r = jnp.reshape(jnp.pad(b2, (0, Lp - L)), (1, Lp)).astype(jnp.float32)
    return dict(w1t=w1t, b1r=b1r, w2t=w2t, b2r=b2r, dim=D, num_labels=L, tn=tn)


def _pick_tm(B):
    # Largest batch tile that amortizes per-step overhead & fills the MXU M dim, while
    # keeping >=2 grid steps for large B (so "parallel" shards across v7x's 2 TCs).
    if B <= 256:
        return _round_up(B, 8)
    if B <= 1024:
        return 256
    return 512


@functools.partial(jax.jit, static_argnames=("tm", "tn", "num_labels"))
def _linear_classifier_fwd(x, w1t, b1r, w2t, b2r, *, tm, tn, num_labels):
    B, D = x.shape
    Dp, H = w1t.shape
    Lp = w2t.shape[1]

    Bp = _round_up(B, tm)
    if (Bp, Dp) != (B, D):
        # Only materialize a padded copy of x when actually needed.
        x = jnp.pad(x, ((0, Bp - B), (0, Dp - D)))

    grid = (Bp // tm, Lp // tn)
    wbytes = jnp.dtype(w1t.dtype).itemsize
    xbytes = jnp.dtype(x.dtype).itemsize

    # Per-step VMEM footprint: double-buffered streamed blocks + resident weights + scratch.
    vmem_need = (
        2 * tm * Dp * xbytes      # x tile
        + 2 * tm * tn * 4         # out tile (f32)
        + Dp * H * wbytes         # W1 (resident)
        + 2 * H * tn * wbytes     # W2 tile
        + (H + Lp) * 4            # biases
        + tm * H * 4              # hidden scratch
    )
    vmem_limit = int(min(max(vmem_need * 5 // 4, 32 * 1024 * 1024), 60 * 1024 * 1024))

    cost = pl.CostEstimate(
        flops=2 * Bp * Dp * H + 2 * Bp * H * Lp,
        transcendentals=0,
        bytes_accessed=(Bp * Dp * xbytes + Dp * H * wbytes + H * Lp * wbytes
                        + Bp * Lp * 4),
    )

    out = pl.pallas_call(
        _mlp_kernel,
        out_shape=jax.ShapeDtypeStruct((Bp, Lp), jnp.float32),
        grid=grid,
        in_specs=[
            pl.BlockSpec((tm, Dp), lambda i, j: (i, 0)),   # x: tiled over batch
            pl.BlockSpec((Dp, H), lambda i, j: (0, 0)),    # W1: resident in VMEM
            pl.BlockSpec((1, H), lambda i, j: (0, 0)),     # b1: resident
            pl.BlockSpec((H, tn), lambda i, j: (0, j)),    # W2: tiled over labels
            pl.BlockSpec((1, tn), lambda i, j: (0, j)),    # b2: tiled over labels
        ],
        out_specs=pl.BlockSpec((tm, tn), lambda i, j: (i, j)),
        scratch_shapes=[pltpu.VMEM((tm, H), jnp.float32)],  # hidden activations
        compiler_params=pltpu.CompilerParams(
            dimension_semantics=("parallel", "arbitrary"),
            vmem_limit_bytes=vmem_limit,
        ),
        cost_estimate=cost,
    )(x, w1t, b1r, w2t, b2r)

    return out[:B, :num_labels]


def linear_classifier(x, params):
    """y = linear2(relu(linear1(x))) with params from prepare_classifier_params()."""
    assert x.ndim == 2 and x.shape[1] == params["dim"]
    tm = _pick_tm(x.shape[0])
    return _linear_classifier_fwd(
        x, params["w1t"], params["b1r"], params["w2t"], params["b2r"],
        tm=tm, tn=params["tn"], num_labels=params["num_labels"])


if __name__ == "__main__":
    key = jax.random.PRNGKey(0)
    kx1, kx2, k1, k2 = jax.random.split(key, 4)
    HI = jax.lax.Precision.HIGHEST

    def make_problem(kx, B, D, L):
        x = jax.random.normal(kx, (B, D), dtype=jnp.float32)
        # PyTorch init: weights ~ N(0, 0.01), biases zero.
        w1 = 0.01 * jax.random.normal(k1, (HIDDEN, D), dtype=jnp.float32)
        b1 = jnp.zeros((HIDDEN,), jnp.float32)
        w2 = 0.01 * jax.random.normal(k2, (L, HIDDEN), dtype=jnp.float32)
        b2 = jnp.zeros((L,), jnp.float32)
        h = jnp.maximum(jnp.dot(x, w1.T, precision=HI) + b1, 0.0)
        ref = jnp.dot(h, w2.T, precision=HI) + b2
        return x, (w1, b1, w2, b2), ref

    # Case 1: ViT-Ti dim (192 -> exercises the lane-pad path), bf16 MXU operands (default).
    x, (w1, b1, w2, b2), ref = make_problem(kx1, B=16, D=192, L=1000)
    params = prepare_classifier_params(w1, b1, w2, b2, compute_dtype=jnp.bfloat16)
    out = linear_classifier(x, params)
    jax.block_until_ready(out)
    assert out.shape == ref.shape, out.shape
    assert bool(jnp.all(jnp.isfinite(out)))
    assert bool(jnp.allclose(out, ref, atol=1e-2, rtol=5e-2)), \
        float(jnp.max(jnp.abs(out - ref)))

    # Case 2: 128-aligned dim (no-pad fast path), exact f32 MXU operands.
    x, (w1, b1, w2, b2), ref = make_problem(kx2, B=16, D=384, L=1000)
    params = prepare_classifier_params(w1, b1, w2, b2, compute_dtype=jnp.float32)
    out = linear_classifier(x, params)
    jax.block_until_ready(out)
    assert out.shape == ref.shape, out.shape
    assert bool(jnp.allclose(out, ref, atol=1e-3, rtol=1e-2)), \
        float(jnp.max(jnp.abs(out - ref)))

    print("KERNEL_OK")
</pallas_src>

<mosaic_0001>
module attributes {stable_mosaic.version = 11 : i64} {
  func.func @_mlp_kernel(%arg0: i32, %arg1: i32, %arg2: memref<16x256xf32, #tpu.memory_space<vmem>>, %arg3: memref<256x256xbf16, #tpu.memory_space<vmem>>, %arg4: memref<1x256xf32, #tpu.memory_space<vmem>>, %arg5: memref<256x1024xbf16, #tpu.memory_space<vmem>>, %arg6: memref<1x1024xf32, #tpu.memory_space<vmem>>, %arg7: memref<16x1024xf32, #tpu.memory_space<vmem>>, %arg8: memref<16x256xf32, #tpu.memory_space<vmem>>) attributes {dimension_semantics = [#tpu.dimension_semantics<parallel>, #tpu.dimension_semantics<arbitrary>], iteration_bounds = array<i64: 1, 1>, scalar_prefetch = 0 : i64, scratch_operands = 1 : i64, tpu.core_type = #tpu.core_type<tc>, window_params = [{transform_indices = @transform_0, window_bounds = array<i64: 16, 256>}, {pipeline_mode = #tpu.pipeline_mode<synchronous>, transform_indices = @transform_1, window_bounds = array<i64: 256, 256>}, {pipeline_mode = #tpu.pipeline_mode<synchronous>, transform_indices = @transform_2, window_bounds = array<i64: 1, 256>}, {transform_indices = @transform_3, window_bounds = array<i64: 256, 1024>}, {transform_indices = @transform_4, window_bounds = array<i64: 1, 1024>}, {transform_indices = @transform_5, window_bounds = array<i64: 16, 1024>}]} {
    %c0_i32 = arith.constant 0 : i32
    %0 = arith.cmpi eq, %arg1, %c0_i32 : i32
    %1 = arith.extui %0 : i1 to i32
    %c0_i32_0 = arith.constant 0 : i32
    %2 = arith.cmpi ne, %1, %c0_i32_0 : i32
    scf.if %2 {
      %c0_8 = arith.constant 0 : index
      %c0_9 = arith.constant 0 : index
      %11 = vector.load %arg2[%c0_8, %c0_9] : memref<16x256xf32, #tpu.memory_space<vmem>>, vector<16x256xf32>
      %12 = arith.truncf %11 : vector<16x256xf32> to vector<16x256xbf16>
      %c0_10 = arith.constant 0 : index
      %c0_11 = arith.constant 0 : index
      %13 = vector.load %arg3[%c0_10, %c0_11] : memref<256x256xbf16, #tpu.memory_space<vmem>>, vector<256x256xbf16>
      %cst_12 = arith.constant dense<0.000000e+00> : vector<16x256xf32>
      %14 = tpu.matmul %12, %13, %cst_12 {dimension_numbers = #tpu.dot_dimension_numbers<[1], [0], [0], [1], [0, 0, 1, 1], [], []>} : vector<16x256xbf16>, vector<256x256xbf16>, vector<16x256xf32> -> vector<16x256xf32>
      %c0_13 = arith.constant 0 : index
      %c0_14 = arith.constant 0 : index
      %15 = vector.load %arg4[%c0_13, %c0_14] : memref<1x256xf32, #tpu.memory_space<vmem>>, vector<1x256xf32>
      %16 = vector.broadcast %15 : vector<1x256xf32> to vector<16x256xf32>
      %17 = arith.addf %14, %16 : vector<16x256xf32>
      %cst_15 = arith.constant 0.000000e+00 : f32
      %18 = vector.broadcast %cst_15 : f32 to vector<16x256xf32>
      %19 = arith.maximumf %17, %18 : vector<16x256xf32>
      %c0_16 = arith.constant 0 : index
      %c0_17 = arith.constant 0 : index
      %20 = vector.load %arg8[%c0_16, %c0_17] : memref<16x256xf32, #tpu.memory_space<vmem>>, vector<16x256xf32>
      tpu.vector_store %arg8[%c0_16, %c0_17], %19 {strides = array<i32>} : memref<16x256xf32, #tpu.memory_space<vmem>>, vector<16x256xf32>,
    } else {
    }
    %c0 = arith.constant 0 : index
    %c0_1 = arith.constant 0 : index
    %3 = vector.load %arg8[%c0, %c0_1] : memref<16x256xf32, #tpu.memory_space<vmem>>, vector<16x256xf32>
    %4 = arith.truncf %3 : vector<16x256xf32> to vector<16x256xbf16>
    %c0_2 = arith.constant 0 : index
    %c0_3 = arith.constant 0 : index
    %5 = vector.load %arg5[%c0_2, %c0_3] : memref<256x1024xbf16, #tpu.memory_space<vmem>>, vector<256x1024xbf16>
    %cst = arith.constant dense<0.000000e+00> : vector<16x1024xf32>
    %6 = tpu.matmul %4, %5, %cst {dimension_numbers = #tpu.dot_dimension_numbers<[1], [0], [0], [1], [0, 0, 1, 1], [], []>} : vector<16x256xbf16>, vector<256x1024xbf16>, vector<16x1024xf32> -> vector<16x1024xf32>
    %c0_4 = arith.constant 0 : index
    %c0_5 = arith.constant 0 : index
    %7 = vector.load %arg6[%c0_4, %c0_5] : memref<1x1024xf32, #tpu.memory_space<vmem>>, vector<1x1024xf32>
    %8 = vector.broadcast %7 : vector<1x1024xf32> to vector<16x1024xf32>
    %9 = arith.addf %6, %8 : vector<16x1024xf32>
    %c0_6 = arith.constant 0 : index
    %c0_7 = arith.constant 0 : index
    %10 = vector.load %arg7[%c0_6, %c0_7] : memref<16x1024xf32, #tpu.memory_space<vmem>>, vector<16x1024xf32>
    tpu.vector_store %arg7[%c0_6, %c0_7], %9 {strides = array<i32>} : memref<16x1024xf32, #tpu.memory_space<vmem>>, vector<16x1024xf32>,
    return
  }
  func.func @transform_0(%arg0: i32, %arg1: i32) -> (i32, i32) {
    %c0_i32 = arith.constant 0 : i32
    %c0_i32_0 = arith.constant 0 : i32
    return %arg0, %c0_i32 : i32, i32
  }
  func.func @transform_1(%arg0: i32, %arg1: i32) -> (i32, i32) {
    %c0_i32 = arith.constant 0 : i32
    %c0_i32_0 = arith.constant 0 : i32
    %c0_i32_1 = arith.constant 0 : i32
    return %c0_i32, %c0_i32_0 : i32, i32
  }
  func.func @transform_2(%arg0: i32, %arg1: i32) -> (i32, i32) {
    %c0_i32 = arith.constant 0 : i32
    %c0_i32_0 = arith.constant 0 : i32
    %c0_i32_1 = arith.constant 0 : i32
    return %c0_i32, %c0_i32_0 : i32, i32
  }
  func.func @transform_3(%arg0: i32, %arg1: i32) -> (i32, i32) {
    %c0_i32 = arith.constant 0 : i32
    %c0_i32_0 = arith.constant 0 : i32
    return %c0_i32, %arg1 : i32, i32
  }
  func.func @transform_4(%arg0: i32, %arg1: i32) -> (i32, i32) {
    %c0_i32 = arith.constant 0 : i32
    %c0_i32_0 = arith.constant 0 : i32
    return %c0_i32, %arg1 : i32, i32
  }
  func.func @transform_5(%arg0: i32, %arg1: i32) -> (i32, i32) {
    %c0_i32 = arith.constant 0 : i32
    return %arg0, %arg1 : i32, i32
  }
}

</mosaic_0001>

<llo_original>
// kernel: _linear_classifier_fwd.1
$region0: #{_linear_classifier_fwd.1}
  #allocation0 [shape = 'u32[]', space=smem, size = 0x4, offset = 0x4, fixed_abs, tag = 'smem constant byte address 0x4 - core index']
  #allocation1 [shape = 'u32[144,128]{1,0:T(1,128)}', space=vmem, size = 0x12000, scoped, tag = 'internal scratch']
  #allocation2 [shape = 'f32[16,256]{1,0:T(8,128)}', space=vmem, size = 0x4000, scoped, tag = 'scratch operand']
  %s0 = inlined_call_operand.vmem [shape: f32[16,256], index: 0, kind: input, shape index: {}]
  %s1 = inlined_call_operand.hbm [shape: bf16[256,256], index: 1, kind: input, shape index: {}]
  %s2 = inlined_call_operand.vmem [shape: f32[1,256], index: 2, kind: input, shape index: {}]
  %s3 = inlined_call_operand.hbm [shape: bf16[256,1024], index: 3, kind: input, shape index: {}]
  %s4 = inlined_call_operand.vmem [shape: f32[1,1024], index: 4, kind: input, shape index: {}]
  %s5 = inlined_call_operand.hbm [shape: f32[16,1024], index: 5, kind: output, shape index: {}]
  %s6 = sld [smem:[#allocation0]]
  $region42: #{_linear_classifier_fwd.1} parent=0
    _
  %s8 = ssub.s32 1, %s6
  %s9 = scalar_select 0, %s8, %s6
  $region1: #{_linear_classifier_fwd.1} parent=0
    #allocation3 [shape = 'u8[131072]{0}', space=vmem, size = 0x20000, scoped, tag = 'input window, operand 1, single buffered']
    #allocation4 [shape = 's32[1]{0}', space=sflag, size = 0x4, scoped, tag = 'scoped memory for _linear_classifier_fwd.1']
    #allocation5 [shape = 's32[1]{0}', space=sflag, size = 0x4, scoped, tag = 'scoped memory for _linear_classifier_fwd.1']
    #allocation6 [shape = 'u8[524288]{0}', space=vmem, size = 0x80000, scoped, tag = 'input window, operand 3, single buffered']
    #allocation7 [shape = 's32[1]{0}', space=sflag, size = 0x4, scoped, tag = 'scoped memory for _linear_classifier_fwd.1']
    #allocation8 [shape = 'u8[65536]{0}', space=vmem, size = 0x10000, scoped, tag = 'output window, operand 0, single buffered']
    %10 = vsyncpa [#allocation4], 0
    %11 = vsyncpa [#allocation7], 0
    %12 = vsyncpa [#allocation5], 0
    // Predicated region
    $region2: #{_linear_classifier_fwd.1} parent=1 // pred_check
      _
    $region3: #{_linear_classifier_fwd.1} parent=1 // pred_check_branch
      %14 = sbr.rel (0) target = $region5
    $region4: #{_linear_classifier_fwd.1} parent=1 // pred_region
      _
    $region5: #{_linear_classifier_fwd.1} parent=1 // pred_fallthru
      _
    // Predicated region
    $region6: #{_linear_classifier_fwd.1} parent=1 // pred_check
      _
    $region7: #{_linear_classifier_fwd.1} parent=1 // pred_check_branch
      %16 = sbr.rel (0) target = $region9
    $region8: #{_linear_classifier_fwd.1} parent=1 // pred_region
      %s18 = ssub.s32 4096, 4096
      %19 = vsyncadd [#allocation4], %s18
      %s20 = sshll.u32 [#allocation3], 4
      %s21 = int_to_ptr.vmem [resolvable:$true] %s20
      %26 = dma.hbm_to_vmem [thread:$0]  %s1, 4096, %s21, [#allocation4], 128, 128, 8
    $region9: #{_linear_classifier_fwd.1} parent=1 // pred_fallthru
      _
    // Predicated region
    $region10: #{_linear_classifier_fwd.1} parent=1 // pred_check
      _
    $region11: #{_linear_classifier_fwd.1} parent=1 // pred_check_branch
      %28 = sbr.rel (0) target = $region13
    $region12: #{_linear_classifier_fwd.1} parent=1 // pred_region
      _
    $region13: #{_linear_classifier_fwd.1} parent=1 // pred_fallthru
      _
    // Predicated region
    $region14: #{_linear_classifier_fwd.1} parent=1 // pred_check
      _
    $region15: #{_linear_classifier_fwd.1} parent=1 // pred_check_branch
      %30 = sbr.rel (0) target = $region17
    $region16: #{_linear_classifier_fwd.1} parent=1 // pred_region
      %s32 = ssub.s32 16384, 16384
      %33 = vsyncadd [#allocation7], %s32
      %s34 = sshll.u32 [#allocation6], 4
      %s35 = int_to_ptr.vmem [resolvable:$true] %s34
      %40 = dma.hbm_to_vmem [thread:$0]  %s3, 16384, %s35, [#allocation7], 512, 512, 32
    $region17: #{_linear_classifier_fwd.1} parent=1 // pred_fallthru
      _
    // Predicated region
    $region18: #{_linear_classifier_fwd.1} parent=1 // pred_check
      _
    $region19: #{_linear_classifier_fwd.1} parent=1 // pred_check_branch
      %42 = sbr.rel (0) target = $region21
    $region20: #{_linear_classifier_fwd.1} parent=1 // pred_region
      _
    $region21: #{_linear_classifier_fwd.1} parent=1 // pred_fallthru
      _
    // Predicated region
    $region22: #{_linear_classifier_fwd.1} parent=1 // pred_check
      _
    $region23: #{_linear_classifier_fwd.1} parent=1 // pred_check_branch
      %44 = sbr.rel (0) target = $region25
    $region24: #{_linear_classifier_fwd.1} parent=1 // pred_region
      %45 = dma.done [#allocation4], 4096
    $region25: #{_linear_classifier_fwd.1} parent=1 // pred_fallthru
      _
    // Predicated region
    $region26: #{_linear_classifier_fwd.1} parent=1 // pred_check
      _
    $region27: #{_linear_classifier_fwd.1} parent=1 // pred_check_branch
      %47 = sbr.rel (0) target = $region29
    $region28: #{_linear_classifier_fwd.1} parent=1 // pred_region
      %48 = dma.done [#allocation7], 16384
    $region29: #{_linear_classifier_fwd.1} parent=1 // pred_fallthru
      _
    %p49 = scmp.eq.s32.totalorder 0, 0
    // Predicated region
    $region30: #{_linear_classifier_fwd.1} parent=1 // pred_check
      %p50 = pneg %p49
    $region31: #{_linear_classifier_fwd.1} parent=1 // pred_check_branch
      %52 = sbr.rel (%p50) target = $region33
    $region32: #{_linear_classifier_fwd.1} parent=1 // pred_region
      %v53 = vld [vmem:[%s0] sm:$0xff]
      %v54 = vld [vmem:[%s0 + $0x8] sm:$0xff]
      %v55 = vld [vmem:[%s0 + $0x10] sm:$0xff]
      %v56 = vld [vmem:[%s0 + $0x18] sm:$0xff]
      %v57 = vpack.c.bf16 %v55, %v53
      %v58 = vpack.c.bf16 %v56, %v54
      %v59 = vld [vmem:[#allocation3] sm:$0xff]
      %v60 = vld [vmem:[#allocation3 + $0x8] sm:$0xff]
      %v61 = vld [vmem:[#allocation3 + $0x10] sm:$0xff]
      %v62 = vld [vmem:[#allocation3 + $0x18] sm:$0xff]
      %v63 = vld [vmem:[#allocation3 + $0x20] sm:$0xff]
      %v64 = vld [vmem:[#allocation3 + $0x28] sm:$0xff]
      %v65 = vld [vmem:[#allocation3 + $0x30] sm:$0xff]
      %v66 = vld [vmem:[#allocation3 + $0x38] sm:$0xff]
      %v67 = vld [vmem:[#allocation3 + $0x40] sm:$0xff]
      %v68 = vld [vmem:[#allocation3 + $0x48] sm:$0xff]
      %v69 = vld [vmem:[#allocation3 + $0x50] sm:$0xff]
      %v70 = vld [vmem:[#allocation3 + $0x58] sm:$0xff]
      %v71 = vld [vmem:[#allocation3 + $0x60] sm:$0xff]
      %v72 = vld [vmem:[#allocation3 + $0x68] sm:$0xff]
      %v73 = vld [vmem:[#allocation3 + $0x70] sm:$0xff]
      %v74 = vld [vmem:[#allocation3 + $0x78] sm:$0xff]
      %v75 = vld [vmem:[#allocation3 + $0x80] sm:$0xff]
      %v76 = vld [vmem:[#allocation3 + $0x88] sm:$0xff]
      %v77 = vld [vmem:[#allocation3 + $0x90] sm:$0xff]
      %v78 = vld [vmem:[#allocation3 + $0x98] sm:$0xff]
      %v79 = vld [vmem:[#allocation3 + $0xa0] sm:$0xff]
      %v80 = vld [vmem:[#allocation3 + $0xa8] sm:$0xff]
      %v81 = vld [vmem:[#allocation3 + $0xb0] sm:$0xff]
      %v82 = vld [vmem:[#allocation3 + $0xb8] sm:$0xff]
      %v83 = vld [vmem:[#allocation3 + $0xc0] sm:$0xff]
      %v84 = vld [vmem:[#allocation3 + $0xc8] sm:$0xff]
      %v85 = vld [vmem:[#allocation3 + $0xd0] sm:$0xff]
      %v86 = vld [vmem:[#allocation3 + $0xd8] sm:$0xff]
      %v87 = vld [vmem:[#allocation3 + $0xe0] sm:$0xff]
      %v88 = vld [vmem:[#allocation3 + $0xe8] sm:$0xff]
      %v89 = vld [vmem:[#allocation3 + $0xf0] sm:$0xff]
      %v90 = vld [vmem:[#allocation3 + $0xf8] sm:$0xff]
      %v91 = vld [vmem:[%s2] sm:$0x3]
      %v93 = vlaneseq
      %v94 = vshrl.u32 %v93, 7
      %v95 = vsub.s32 0, %v94
      %v96 = vrot.slane %v91, %v95
      %v97 = vlaneseq
      %v98 = vshrl.u32 %v97, 7
      %v99 = vsub.s32 1, %v98
      %v100 = vrot.slane %v91, %v99
      %v135 = vunpack.c.l.b16 %v59
      %v136 = vunpack.c.h.b16 %v59
      %v137 = vunpack.c.l.b16 %v60
      %v138 = vunpack.c.h.b16 %v60
      %v139 = vunpack.c.l.b16 %v61
      %v140 = vunpack.c.h.b16 %v61
      %v141 = vunpack.c.l.b16 %v62
      %v142 = vunpack.c.h.b16 %v62
      %v143 = vunpack.c.l.b16 %v63
      %v144 = vunpack.c.h.b16 %v63
      %v145 = vunpack.c.l.b16 %v64
      %v146 = vunpack.c.h.b16 %v64
      %v147 = vunpack.c.l.b16 %v65
      %v148 = vunpack.c.h.b16 %v65
      %v149 = vunpack.c.l.b16 %v66
      %v150 = vunpack.c.h.b16 %v66
      %v151 = vunpack.c.l.b16 %v67
      %v152 = vunpack.c.h.b16 %v67
      %v153 = vunpack.c.l.b16 %v68
      %v154 = vunpack.c.h.b16 %v68
      %v155 = vunpack.c.l.b16 %v69
      %v156 = vunpack.c.h.b16 %v69
      %v157 = vunpack.c.l.b16 %v70
      %v158 = vunpack.c.h.b16 %v70
      %v159 = vunpack.c.l.b16 %v71
      %v160 = vunpack.c.h.b16 %v71
      %v161 = vunpack.c.l.b16 %v72
      %v162 = vunpack.c.h.b16 %v72
      %v163 = vunpack.c.l.b16 %v73
      %v164 = vunpack.c.h.b16 %v73
      %v165 = vunpack.c.l.b16 %v74
      %v166 = vunpack.c.h.b16 %v74
      %v167 = vunpack.c.l.b16 %v75
      %v168 = vunpack.c.h.b16 %v75
      %v169 = vunpack.c.l.b16 %v76
      %v170 = vunpack.c.h.b16 %v76
      %v171 = vunpack.c.l.b16 %v77
      %v172 = vunpack.c.h.b16 %v77
      %v173 = vunpack.c.l.b16 %v78
      %v174 = vunpack.c.h.b16 %v78
      %v175 = vunpack.c.l.b16 %v79
      %v176 = vunpack.c.h.b16 %v79
      %v177 = vunpack.c.l.b16 %v80
      %v178 = vunpack.c.h.b16 %v80
      %v179 = vunpack.c.l.b16 %v81
      %v180 = vunpack.c.h.b16 %v81
      %v181 = vunpack.c.l.b16 %v82
      %v182 = vunpack.c.h.b16 %v82
      %v183 = vunpack.c.l.b16 %v83
      %v184 = vunpack.c.h.b16 %v83
      %v185 = vunpack.c.l.b16 %v84
      %v186 = vunpack.c.h.b16 %v84
      %v187 = vunpack.c.l.b16 %v85
      %v188 = vunpack.c.h.b16 %v85
      %v189 = vunpack.c.l.b16 %v86
      %v190 = vunpack.c.h.b16 %v86
      %v191 = vunpack.c.l.b16 %v87
      %v192 = vunpack.c.h.b16 %v87
      %v193 = vunpack.c.l.b16 %v88
      %v194 = vunpack.c.h.b16 %v88
      %v195 = vunpack.c.l.b16 %v89
      %v196 = vunpack.c.h.b16 %v89
      %v197 = vunpack.c.l.b16 %v90
      %v198 = vunpack.c.h.b16 %v90
      %v199 = vpack.c.b16 %v137, %v135
      %v200 = vpack.c.b16 %v138, %v136
      %v201 = vpack.c.b16 %v141, %v139
      %v202 = vpack.c.b16 %v142, %v140
      %v203 = vpack.c.b16 %v145, %v143
      %v204 = vpack.c.b16 %v146, %v144
      %v205 = vpack.c.b16 %v149, %v147
      %v206 = vpack.c.b16 %v150, %v148
      %v207 = vpack.c.b16 %v153, %v151
      %v208 = vpack.c.b16 %v154, %v152
      %v209 = vpack.c.b16 %v157, %v155
      %v210 = vpack.c.b16 %v158, %v156
      %v211 = vpack.c.b16 %v161, %v159
      %v212 = vpack.c.b16 %v162, %v160
      %v213 = vpack.c.b16 %v165, %v163
      %v214 = vpack.c.b16 %v166, %v164
      %v215 = vpack.c.b16 %v169, %v167
      %v216 = vpack.c.b16 %v170, %v168
      %v217 = vpack.c.b16 %v173, %v171
      %v218 = vpack.c.b16 %v174, %v172
      %v219 = vpack.c.b16 %v177, %v175
      %v220 = vpack.c.b16 %v178, %v176
      %v221 = vpack.c.b16 %v181, %v179
      %v222 = vpack.c.b16 %v182, %v180
      %v223 = vpack.c.b16 %v185, %v183
      %v224 = vpack.c.b16 %v186, %v184
      %v225 = vpack.c.b16 %v189, %v187
      %v226 = vpack.c.b16 %v190, %v188
      %v227 = vpack.c.b16 %v193, %v191
      %v228 = vpack.c.b16 %v194, %v192
      %v229 = vpack.c.b16 %v197, %v195
      %v230 = vpack.c.b16 %v198, %v196
      %263 = vmatprep.subr.bf16.mxu0 %v200
      %264 = vmatpush1.bf16.msra.mxu0 %v199
      %265 = vmatprep.subr.bf16.mxu0 %v202
      %266 = vmatpush1.bf16.msra.mxu0 %v201
      %267 = vmatprep.subr.bf16.mxu0 %v204
      %268 = vmatpush1.bf16.msra.mxu0 %v203
      %269 = vmatprep.subr.bf16.mxu0 %v206
      %270 = vmatpush1.bf16.msra.mxu0 %v205
      %271 = vmatprep.subr.bf16.mxu0 %v208
      %272 = vmatpush1.bf16.msra.mxu0 %v207
      %273 = vmatprep.subr.bf16.mxu0 %v210
      %274 = vmatpush1.bf16.msra.mxu0 %v209
      %275 = vmatprep.subr.bf16.mxu0 %v212
      %276 = vmatpush1.bf16.msra.mxu0 %v211
      %277 = vmatprep.subr.bf16.mxu0 %v214
      %278 = vmatpush1.bf16.msra.mxu0 %v213
      %279 = vmatprep.subr.bf16.mxu0 %v216
      %280 = vmatpush1.bf16.msra.mxu0 %v215
      %281 = vmatprep.subr.bf16.mxu0 %v218
      %282 = vmatpush1.bf16.msra.mxu0 %v217
      %283 = vmatprep.subr.bf16.mxu0 %v220
      %284 = vmatpush1.bf16.msra.mxu0 %v219
      %285 = vmatprep.subr.bf16.mxu0 %v222
      %286 = vmatpush1.bf16.msra.mxu0 %v221
      %287 = vmatprep.subr.bf16.mxu0 %v224
      %288 = vmatpush1.bf16.msra.mxu0 %v223
      %289 = vmatprep.subr.bf16.mxu0 %v226
      %290 = vmatpush1.bf16.msra.mxu0 %v225
      %291 = vmatprep.subr.bf16.mxu0 %v228
      %292 = vmatpush1.bf16.msra.mxu0 %v227
      %293 = vmatprep.subr.bf16.mxu0 %v230
      %294 = vmatpush1.bf16.msra.mxu0 %v229
      %295 = vmatprep.mubr.bf16.mxu0 %v58
      %296 = vmatmul.mubr.bf16.gmra.mrb[0].mxu0 %v57
      %v297 = vpop.f32.mrb[0].mxu0
      %v298 = vadd.f32 %v96, %v297
      %v299 = vpop.f32.mrb[0].mxu0
      %v300 = vadd.f32 %v100, %v299
      %v301 = vpop.f32.mrb[0].mxu0
      %v302 = vadd.f32 %v96, %v301
      %v303 = vpop.f32.mrb[0].mxu0
      %v304 = vadd.f32 %v100, %v303
      %305 = vdwg.mxu0
      %v306 = vmax.f32 %v298, 0.0
      %v307 = vmax.f32 %v300, 0.0
      %v308 = vmax.f32 %v302, 0.0
      %v309 = vmax.f32 %v304, 0.0
      %310 = vst [vmem:[#allocation2] sm:$0xff] %v306
      %311 = vst [vmem:[#allocation2 + $0x8] sm:$0xff] %v307
      %312 = vst [vmem:[#allocation2 + $0x10] sm:$0xff] %v308
      %313 = vst [vmem:[#allocation2 + $0x18] sm:$0xff] %v309
    $region33: #{_linear_classifier_fwd.1} parent=1 // pred_fallthru
      _
    %v314 = vld [vmem:[#allocation2] sm:$0xff]
    %v315 = vld [vmem:[#allocation2 + $0x8] sm:$0xff]
    %v316 = vld [vmem:[#allocation2 + $0x10] sm:$0xff]
    %v317 = vld [vmem:[#allocation2 + $0x18] sm:$0xff]
    %v318 = vpack.c.bf16 %v316, %v314
    %v319 = vpack.c.bf16 %v317, %v315
    %v320 = vld [vmem:[#allocation6] sm:$0xff]
    %v321 = vld [vmem:[#allocation6 + $0x8] sm:$0xff]
    %v322 = vld [vmem:[#allocation6 + $0x10] sm:$0xff]
    %v323 = vld [vmem:[#allocation6 + $0x18] sm:$0xff]
    %v324 = vld [vmem:[#allocation6 + $0x20] sm:$0xff]
    %v325 = vld [vmem:[#allocation6 + $0x28] sm:$0xff]
    %v326 = vld [vmem:[#allocation6 + $0x30] sm:$0xff]
    %v327 = vld [vmem:[#allocation6 + $0x38] sm:$0xff]
    %v328 = vld [vmem:[#allocation6 + $0x40] sm:$0xff]
    %v329 = vld [vmem:[#allocation6 + $0x48] sm:$0xff]
    %v330 = vld [vmem:[#allocation6 + $0x50] sm:$0xff]
    %v331 = vld [vmem:[#allocation6 + $0x58] sm:$0xff]
    %v332 = vld [vmem:[#allocation6 + $0x60] sm:$0xff]
    %v333 = vld [vmem:[#allocation6 + $0x68] sm:$0xff]
    %v334 = vld [vmem:[#allocation6 + $0x70] sm:$0xff]
    %v335 = vld [vmem:[#allocation6 + $0x78] sm:$0xff]
    %v336 = vld [vmem:[#allocation6 + $0x80] sm:$0xff]
    %v337 = vld [vmem:[#allocation6 + $0x88] sm:$0xff]
    %v338 = vld [vmem:[#allocation6 + $0x90] sm:$0xff]
    %v339 = vld [vmem:[#allocation6 + $0x98] sm:$0xff]
    %v340 = vld [vmem:[#allocation6 + $0xa0] sm:$0xff]
    %v341 = vld [vmem:[#allocation6 + $0xa8] sm:$0xff]
    %v342 = vld [vmem:[#allocation6 + $0xb0] sm:$0xff]
    %v343 = vld [vmem:[#allocation6 + $0xb8] sm:$0xff]
    %v344 = vld [vmem:[#allocation6 + $0xc0] sm:$0xff]
    %v345 = vld [vmem:[#allocation6 + $0xc8] sm:$0xff]
    %v346 = vld [vmem:[#allocation6 + $0xd0] sm:$0xff]
    %v347 = vld [vmem:[#allocation6 + $0xd8] sm:$0xff]
    %v348 = vld [vmem:[#allocation6 + $0xe0] sm:$0xff]
    %v349 = vld [vmem:[#allocation6 + $0xe8] sm:$0xff]
    %v350 = vld [vmem:[#allocation6 + $0xf0] sm:$0xff]
    %v351 = vld [vmem:[#allocation6 + $0xf8] sm:$0xff]
    %v352 = vld [vmem:[#allocation6 + $0x100] sm:$0xff]
    %v353 = vld [vmem:[#allocation6 + $0x108] sm:$0xff]
    %v354 = vld [vmem:[#allocation6 + $0x110] sm:$0xff]
    %v355 = vld [vmem:[#allocation6 + $0x118] sm:$0xff]
    %v356 = vld [vmem:[#allocation6 + $0x120] sm:$0xff]
    %v357 = vld [vmem:[#allocation6 + $0x128] sm:$0xff]
    %v358 = vld [vmem:[#allocation6 + $0x130] sm:$0xff]
    %v359 = vld [vmem:[#allocation6 + $0x138] sm:$0xff]
    %v360 = vld [vmem:[#allocation6 + $0x140] sm:$0xff]
    %v361 = vld [vmem:[#allocation6 + $0x148] sm:$0xff]
    %v362 = vld [vmem:[#allocation6 + $0x150] sm:$0xff]
    %v363 = vld [vmem:[#allocation6 + $0x158] sm:$0xff]
    %v364 = vld [vmem:[#allocation6 + $0x160] sm:$0xff]
    %v365 = vld [vmem:[#allocation6 + $0x168] sm:$0xff]
    %v366 = vld [vmem:[#allocation6 + $0x170] sm:$0xff]
    %v367 = vld [vmem:[#allocation6 + $0x178] sm:$0xff]
    %v368 = vld [vmem:[#allocation6 + $0x180] sm:$0xff]
    %v369 = vld [vmem:[#allocation6 + $0x188] sm:$0xff]
    %v370 = vld [vmem:[#allocation6 + $0x190] sm:$0xff]
    %v371 = vld [vmem:[#allocation6 + $0x198] sm:$0xff]
    %v372 = vld [vmem:[#allocation6 + $0x1a0] sm:$0xff]
    %v373 = vld [vmem:[#allocation6 + $0x1a8] sm:$0xff]
    %v374 = vld [vmem:[#allocation6 + $0x1b0] sm:$0xff]
    %v375 = vld [vmem:[#allocation6 + $0x1b8] sm:$0xff]
    %v376 = vld [vmem:[#allocation6 + $0x1c0] sm:$0xff]
    %v377 = vld [vmem:[#allocation6 + $0x1c8] sm:$0xff]
    %v378 = vld [vmem:[#allocation6 + $0x1d0] sm:$0xff]
    %v379 = vld [vmem:[#allocation6 + $0x1d8] sm:$0xff]
    %v380 = vld [vmem:[#allocation6 + $0x1e0] sm:$0xff]
    %v381 = vld [vmem:[#allocation6 + $0x1e8] sm:$0xff]
    %v382 = vld [vmem:[#allocation6 + $0x1f0] sm:$0xff]
    %v383 = vld [vmem:[#allocation6 + $0x1f8] sm:$0xff]
    %v384 = vld [vmem:[#allocation6 + $0x200] sm:$0xff]
    %v385 = vld [vmem:[#allocation6 + $0x208] sm:$0xff]
    %v386 = vld [vmem:[#allocation6 + $0x210] sm:$0xff]
    %v387 = vld [vmem:[#allocation6 + $0x218] sm:$0xff]
    %v388 = vld [vmem:[#allocation6 + $0x220] sm:$0xff]
    %v389 = vld [vmem:[#allocation6 + $0x228] sm:$0xff]
    %v390 = vld [vmem:[#allocation6 + $0x230] sm:$0xff]
    %v391 = vld [vmem:[#allocation6 + $0x238] sm:$0xff]
    %v392 = vld [vmem:[#allocation6 + $0x240] sm:$0xff]
    %v393 = vld [vmem:[#allocation6 + $0x248] sm:$0xff]
    %v394 = vld [vmem:[#allocation6 + $0x250] sm:$0xff]
    %v395 = vld [vmem:[#allocation6 + $0x258] sm:$0xff]
    %v396 = vld [vmem:[#allocation6 + $0x260] sm:$0xff]
    %v397 = vld [vmem:[#allocation6 + $0x268] sm:$0xff]
    %v398 = vld [vmem:[#allocation6 + $0x270] sm:$0xff]
    %v399 = vld [vmem:[#allocation6 + $0x278] sm:$0xff]
    %v400 = vld [vmem:[#allocation6 + $0x280] sm:$0xff]
    %v401 = vld [vmem:[#allocation6 + $0x288] sm:$0xff]
    %v402 = vld [vmem:[#allocation6 + $0x290] sm:$0xff]
    %v403 = vld [vmem:[#allocation6 + $0x298] sm:$0xff]
    %v404 = vld [vmem:[#allocation6 + $0x2a0] sm:$0xff]
    %v405 = vld [vmem:[#allocation6 + $0x2a8] sm:$0xff]
    %v406 = vld [vmem:[#allocation6 + $0x2b0] sm:$0xff]
    %v407 = vld [vmem:[#allocation6 + $0x2b8] sm:$0xff]
    %v408 = vld [vmem:[#allocation6 + $0x2c0] sm:$0xff]
    %v409 = vld [vmem:[#allocation6 + $0x2c8] sm:$0xff]
    %v410 = vld [vmem:[#allocation6 + $0x2d0] sm:$0xff]
    %v411 = vld [vmem:[#allocation6 + $0x2d8] sm:$0xff]
    %v412 = vld [vmem:[#allocation6 + $0x2e0] sm:$0xff]
    %v413 = vld [vmem:[#allocation6 + $0x2e8] sm:$0xff]
    %v414 = vld [vmem:[#allocation6 + $0x2f0] sm:$0xff]
    %v415 = vld [vmem:[#allocation6 + $0x2f8] sm:$0xff]
    %v416 = vld [vmem:[#allocation6 + $0x300] sm:$0xff]
    %v417 = vld [vmem:[#allocation6 + $0x308] sm:$0xff]
    %v418 = vld [vmem:[#allocation6 + $0x310] sm:$0xff]
    %v419 = vld [vmem:[#allocation6 + $0x318] sm:$0xff]
    %v420 = vld [vmem:[#allocation6 + $0x320] sm:$0xff]
    %v421 = vld [vmem:[#allocation6 + $0x328] sm:$0xff]
    %v422 = vld [vmem:[#allocation6 + $0x330] sm:$0xff]
    %v423 = vld [vmem:[#allocation6 + $0x338] sm:$0xff]
    %v424 = vld [vmem:[#allocation6 + $0x340] sm:$0xff]
    %v425 = vld [vmem:[#allocation6 + $0x348] sm:$0xff]
    %v426 = vld [vmem:[#allocation6 + $0x350] sm:$0xff]
    %v427 = vld [vmem:[#allocation6 + $0x358] sm:$0xff]
    %v428 = vld [vmem:[#allocation6 + $0x360] sm:$0xff]
    %v429 = vld [vmem:[#allocation6 + $0x368] sm:$0xff]
    %v430 = vld [vmem:[#allocation6 + $0x370] sm:$0xff]
    %v431 = vld [vmem:[#allocation6 + $0x378] sm:$0xff]
    %v432 = vld [vmem:[#allocation6 + $0x380] sm:$0xff]
    %v433 = vld [vmem:[#allocation6 + $0x388] sm:$0xff]
    %v434 = vld [vmem:[#allocation6 + $0x390] sm:$0xff]
    %v435 = vld [vmem:[#allocation6 + $0x398] sm:$0xff]
    %v436 = vld [vmem:[#allocation6 + $0x3a0] sm:$0xff]
    %v437 = vld [vmem:[#allocation6 + $0x3a8] sm:$0xff]
    %v438 = vld [vmem:[#allocation6 + $0x3b0] sm:$0xff]
    %v439 = vld [vmem:[#allocation6 + $0x3b8] sm:$0xff]
    %v440 = vld [vmem:[#allocation6 + $0x3c0] sm:$0xff]
    %v441 = vld [vmem:[#allocation6 + $0x3c8] sm:$0xff]
    %v442 = vld [vmem:[#allocation6 + $0x3d0] sm:$0xff]
    %v443 = vld [vmem:[#allocation6 + $0x3d8] sm:$0xff]
    %v444 = vld [vmem:[#allocation6 + $0x3e0] sm:$0xff]
    %v445 = vld [vmem:[#allocation6 + $0x3e8] sm:$0xff]
    %v446 = vld [vmem:[#allocation6 + $0x3f0] sm:$0xff]
    %v447 = vld [vmem:[#allocation6 + $0x3f8] sm:$0xff]
    %v448 = vld [vmem:[%s4] sm:$0xff]
    %v450 = vlaneseq
    %v451 = vshrl.u32 %v450, 7
    %v452 = vsub.s32 0, %v451
    %v453 = vrot.slane %v448, %v452
    %v454 = vlaneseq
    %v455 = vshrl.u32 %v454, 7
    %v456 = vsub.s32 1, %v455
    %v457 = vrot.slane %v448, %v456
    %v458 = vlaneseq
    %v459 = vshrl.u32 %v458, 7
    %v460 = vsub.s32 2, %v459
    %v461 = vrot.slane %v448, %v460
    %v462 = vlaneseq
    %v463 = vshrl.u32 %v462, 7
    %v464 = vsub.s32 3, %v463
    %v465 = vrot.slane %v448, %v464
    %v466 = vlaneseq
    %v467 = vshrl.u32 %v466, 7
    %v468 = vsub.s32 4, %v467
    %v469 = vrot.slane %v448, %v468
    %v470 = vlaneseq
    %v471 = vshrl.u32 %v470, 7
    %v472 = vsub.s32 5, %v471
    %v473 = vrot.slane %v448, %v472
    %v474 = vlaneseq
    %v475 = vshrl.u32 %v474, 7
    %v476 = vsub.s32 6, %v475
    %v477 = vrot.slane %v448, %v476
    %v478 = vlaneseq
    %v479 = vshrl.u32 %v478, 7
    %v480 = vsub.s32 7, %v479
    %v481 = vrot.slane %v448, %v480
    %v618 = vunpack.c.l.b16 %v320
    %v619 = vunpack.c.h.b16 %v320
    %v620 = vunpack.c.l.b16 %v321
    %v621 = vunpack.c.h.b16 %v321
    %v622 = vunpack.c.l.b16 %v322
    %v623 = vunpack.c.h.b16 %v322
    %v624 = vunpack.c.l.b16 %v323
    %v625 = vunpack.c.h.b16 %v323
    %v626 = vunpack.c.l.b16 %v324
    %v627 = vunpack.c.h.b16 %v324
    %v628 = vunpack.c.l.b16 %v325
    %v629 = vunpack.c.h.b16 %v325
    %v630 = vunpack.c.l.b16 %v326
    %v631 = vunpack.c.h.b16 %v326
    %v632 = vunpack.c.l.b16 %v327
    %v633 = vunpack.c.h.b16 %v327
    %v634 = vunpack.c.l.b16 %v328
    %v635 = vunpack.c.h.b16 %v328
    %v636 = vunpack.c.l.b16 %v329
    %v637 = vunpack.c.h.b16 %v329
    %v638 = vunpack.c.l.b16 %v330
    %v639 = vunpack.c.h.b16 %v330
    %v640 = vunpack.c.l.b16 %v331
    %v641 = vunpack.c.h.b16 %v331
    %v642 = vunpack.c.l.b16 %v332
    %v643 = vunpack.c.h.b16 %v332
    %v644 = vunpack.c.l.b16 %v333
    %v645 = vunpack.c.h.b16 %v333
    %v646 = vunpack.c.l.b16 %v334
    %v647 = vunpack.c.h.b16 %v334
    %v648 = vunpack.c.l.b16 %v335
    %v649 = vunpack.c.h.b16 %v335
    %v650 = vunpack.c.l.b16 %v336
    %v651 = vunpack.c.h.b16 %v336
    %v652 = vunpack.c.l.b16 %v337
    %v653 = vunpack.c.h.b16 %v337
    %v654 = vunpack.c.l.b16 %v338
    %v655 = vunpack.c.h.b16 %v338
    %v656 = vunpack.c.l.b16 %v339
    %v657 = vunpack.c.h.b16 %v339
    %v658 = vunpack.c.l.b16 %v340
    %v659 = vunpack.c.h.b16 %v340
    %v660 = vunpack.c.l.b16 %v341
    %v661 = vunpack.c.h.b16 %v341
    %v662 = vunpack.c.l.b16 %v342
    %v663 = vunpack.c.h.b16 %v342
    %v664 = vunpack.c.l.b16 %v343
    %v665 = vunpack.c.h.b16 %v343
    %v666 = vunpack.c.l.b16 %v344
    %v667 = vunpack.c.h.b16 %v344
    %v668 = vunpack.c.l.b16 %v345
    %v669 = vunpack.c.h.b16 %v345
    %v670 = vunpack.c.l.b16 %v346
    %v671 = vunpack.c.h.b16 %v346
    %v672 = vunpack.c.l.b16 %v347
    %v673 = vunpack.c.h.b16 %v347
    %v674 = vunpack.c.l.b16 %v348
    %v675 = vunpack.c.h.b16 %v348
    %v676 = vunpack.c.l.b16 %v349
    %v677 = vunpack.c.h.b16 %v349
    %v678 = vunpack.c.l.b16 %v350
    %v679 = vunpack.c.h.b16 %v350
    %v680 = vunpack.c.l.b16 %v351
    %v681 = vunpack.c.h.b16 %v351
    %v682 = vunpack.c.l.b16 %v352
    %v683 = vunpack.c.h.b16 %v352
    %v684 = vunpack.c.l.b16 %v353
    %v685 = vunpack.c.h.b16 %v353
    %v686 = vunpack.c.l.b16 %v354
    %v687 = vunpack.c.h.b16 %v354
    %v688 = vunpack.c.l.b16 %v355
    %v689 = vunpack.c.h.b16 %v355
    %v690 = vunpack.c.l.b16 %v356
    %v691 = vunpack.c.h.b16 %v356
    %v692 = vunpack.c.l.b16 %v357
    %v693 = vunpack.c.h.b16 %v357
    %v694 = vunpack.c.l.b16 %v358
    %v695 = vunpack.c.h.b16 %v358
    %v696 = vunpack.c.l.b16 %v359
    %v697 = vunpack.c.h.b16 %v359
    %v698 = vunpack.c.l.b16 %v360
    %v699 = vunpack.c.h.b16 %v360
    %v700 = vunpack.c.l.b16 %v361
    %v701 = vunpack.c.h.b16 %v361
    %v702 = vunpack.c.l.b16 %v362
    %v703 = vunpack.c.h.b16 %v362
    %v704 = vunpack.c.l.b16 %v363
    %v705 = vunpack.c.h.b16 %v363
    %v706 = vunpack.c.l.b16 %v364
    %v707 = vunpack.c.h.b16 %v364
    %v708 = vunpack.c.l.b16 %v365
    %v709 = vunpack.c.h.b16 %v365
    %v710 = vunpack.c.l.b16 %v366
    %v711 = vunpack.c.h.b16 %v366
    %v712 = vunpack.c.l.b16 %v367
    %v713 = vunpack.c.h.b16 %v367
    %v714 = vunpack.c.l.b16 %v368
    %v715 = vunpack.c.h.b16 %v368
    %v716 = vunpack.c.l.b16 %v369
    %v717 = vunpack.c.h.b16 %v369
    %v718 = vunpack.c.l.b16 %v370
    %v719 = vunpack.c.h.b16 %v370
    %v720 = vunpack.c.l.b16 %v371
    %v721 = vunpack.c.h.b16 %v371
    %v722 = vunpack.c.l.b16 %v372
    %v723 = vunpack.c.h.b16 %v372
    %v724 = vunpack.c.l.b16 %v373
    %v725 = vunpack.c.h.b16 %v373
    %v726 = vunpack.c.l.b16 %v374
    %v727 = vunpack.c.h.b16 %v374
    %v728 = vunpack.c.l.b16 %v375
    %v729 = vunpack.c.h.b16 %v375
    %v730 = vunpack.c.l.b16 %v376
    %v731 = vunpack.c.h.b16 %v376
    %v732 = vunpack.c.l.b16 %v377
    %v733 = vunpack.c.h.b16 %v377
    %v734 = vunpack.c.l.b16 %v378
    %v735 = vunpack.c.h.b16 %v378
    %v736 = vunpack.c.l.b16 %v379
    %v737 = vunpack.c.h.b16 %v379
    %v738 = vunpack.c.l.b16 %v380
    %v739 = vunpack.c.h.b16 %v380
    %v740 = vunpack.c.l.b16 %v381
    %v741 = vunpack.c.h.b16 %v381
    %v742 = vunpack.c.l.b16 %v382
    %v743 = vunpack.c.h.b16 %v382
    %v744 = vunpack.c.l.b16 %v383
    %v745 = vunpack.c.h.b16 %v383
    %v746 = vunpack.c.l.b16 %v384
    %v747 = vunpack.c.h.b16 %v384
    %v748 = vunpack.c.l.b16 %v385
    %v749 = vunpack.c.h.b16 %v385
    %v750 = vunpack.c.l.b16 %v386
    %v751 = vunpack.c.h.b16 %v386
    %v752 = vunpack.c.l.b16 %v387
    %v753 = vunpack.c.h.b16 %v387
    %v754 = vunpack.c.l.b16 %v388
    %v755 = vunpack.c.h.b16 %v388
    %v756 = vunpack.c.l.b16 %v389
    %v757 = vunpack.c.h.b16 %v389
    %v758 = vunpack.c.l.b16 %v390
    %v759 = vunpack.c.h.b16 %v390
    %v760 = vunpack.c.l.b16 %v391
    %v761 = vunpack.c.h.b16 %v391
    %v762 = vunpack.c.l.b16 %v392
    %v763 = vunpack.c.h.b16 %v392
    %v764 = vunpack.c.l.b16 %v393
    %v765 = vunpack.c.h.b16 %v393
    %v766 = vunpack.c.l.b16 %v394
    %v767 = vunpack.c.h.b16 %v394
    %v768 = vunpack.c.l.b16 %v395
    %v769 = vunpack.c.h.b16 %v395
    %v770 = vunpack.c.l.b16 %v396
    %v771 = vunpack.c.h.b16 %v396
    %v772 = vunpack.c.l.b16 %v397
    %v773 = vunpack.c.h.b16 %v397
    %v774 = vunpack.c.l.b16 %v398
    %v775 = vunpack.c.h.b16 %v398
    %v776 = vunpack.c.l.b16 %v399
    %v777 = vunpack.c.h.b16 %v399
    %v778 = vunpack.c.l.b16 %v400
    %v779 = vunpack.c.h.b16 %v400
    %v780 = vunpack.c.l.b16 %v401
    %v781 = vunpack.c.h.b16 %v401
    %v782 = vunpack.c.l.b16 %v402
    %v783 = vunpack.c.h.b16 %v402
    %v784 = vunpack.c.l.b16 %v403
    %v785 = vunpack.c.h.b16 %v403
    %v786 = vunpack.c.l.b16 %v404
    %v787 = vunpack.c.h.b16 %v404
    %v788 = vunpack.c.l.b16 %v405
    %v789 = vunpack.c.h.b16 %v405
    %v790 = vunpack.c.l.b16 %v406
    %v791 = vunpack.c.h.b16 %v406
    %v792 = vunpack.c.l.b16 %v407
    %v793 = vunpack.c.h.b16 %v407
    %v794 = vunpack.c.l.b16 %v408
    %v795 = vunpack.c.h.b16 %v408
    %v796 = vunpack.c.l.b16 %v409
    %v797 = vunpack.c.h.b16 %v409
    %v798 = vunpack.c.l.b16 %v410
    %v799 = vunpack.c.h.b16 %v410
    %v800 = vunpack.c.l.b16 %v411
    %v801 = vunpack.c.h.b16 %v411
    %v802 = vunpack.c.l.b16 %v412
    %v803 = vunpack.c.h.b16 %v412
    %v804 = vunpack.c.l.b16 %v413
    %v805 = vunpack.c.h.b16 %v413
    %v806 = vunpack.c.l.b16 %v414
    %v807 = vunpack.c.h.b16 %v414
    %v808 = vunpack.c.l.b16 %v415
    %v809 = vunpack.c.h.b16 %v415
    %v810 = vunpack.c.l.b16 %v416
    %v811 = vunpack.c.h.b16 %v416
    %v812 = vunpack.c.l.b16 %v417
    %v813 = vunpack.c.h.b16 %v417
    %v814 = vunpack.c.l.b16 %v418
    %v815 = vunpack.c.h.b16 %v418
    %v816 = vunpack.c.l.b16 %v419
    %v817 = vunpack.c.h.b16 %v419
    %v818 = vunpack.c.l.b16 %v420
    %v819 = vunpack.c.h.b16 %v420
    %v820 = vunpack.c.l.b16 %v421
    %v821 = vunpack.c.h.b16 %v421
    %v822 = vunpack.c.l.b16 %v422
    %v823 = vunpack.c.h.b16 %v422
    %v824 = vunpack.c.l.b16 %v423
    %v825 = vunpack.c.h.b16 %v423
    %v826 = vunpack.c.l.b16 %v424
    %v827 = vunpack.c.h.b16 %v424
    %v828 = vunpack.c.l.b16 %v425
    %v829 = vunpack.c.h.b16 %v425
    %v830 = vunpack.c.l.b16 %v426
    %v831 = vunpack.c.h.b16 %v426
    %v832 = vunpack.c.l.b16 %v427
    %v833 = vunpack.c.h.b16 %v427
    %v834 = vunpack.c.l.b16 %v428
    %v835 = vunpack.c.h.b16 %v428
    %v836 = vunpack.c.l.b16 %v429
    %v837 = vunpack.c.h.b16 %v429
    %v838 = vunpack.c.l.b16 %v430
    %v839 = vunpack.c.h.b16 %v430
    %v840 = vunpack.c.l.b16 %v431
    %v841 = vunpack.c.h.b16 %v431
    %v842 = vunpack.c.l.b16 %v432
    %v843 = vunpack.c.h.b16 %v432
    %v844 = vunpack.c.l.b16 %v433
    %v845 = vunpack.c.h.b16 %v433
    %v846 = vunpack.c.l.b16 %v434
    %v847 = vunpack.c.h.b16 %v434
    %v848 = vunpack.c.l.b16 %v435
    %v849 = vunpack.c.h.b16 %v435
    %v850 = vunpack.c.l.b16 %v436
    %v851 = vunpack.c.h.b16 %v436
    %v852 = vunpack.c.l.b16 %v437
    %v853 = vunpack.c.h.b16 %v437
    %v854 = vunpack.c.l.b16 %v438
    %v855 = vunpack.c.h.b16 %v438
    %v856 = vunpack.c.l.b16 %v439
    %v857 = vunpack.c.h.b16 %v439
    %v858 = vunpack.c.l.b16 %v440
    %v859 = vunpack.c.h.b16 %v440
    %v860 = vunpack.c.l.b16 %v441
    %v861 = vunpack.c.h.b16 %v441
    %v862 = vunpack.c.l.b16 %v442
    %v863 = vunpack.c.h.b16 %v442
    %v864 = vunpack.c.l.b16 %v443
    %v865 = vunpack.c.h.b16 %v443
    %v866 = vunpack.c.l.b16 %v444
    %v867 = vunpack.c.h.b16 %v444
    %v868 = vunpack.c.l.b16 %v445
    %v869 = vunpack.c.h.b16 %v445
    %v870 = vunpack.c.l.b16 %v446
    %v871 = vunpack.c.h.b16 %v446
    %v872 = vunpack.c.l.b16 %v447
    %v873 = vunpack.c.h.b16 %v447
    %v874 = vpack.c.b16 %v626, %v618
    %v875 = vpack.c.b16 %v627, %v619
    %v876 = vpack.c.b16 %v628, %v620
    %v877 = vpack.c.b16 %v629, %v621
    %v878 = vpack.c.b16 %v630, %v622
    %v879 = vpack.c.b16 %v631, %v623
    %v880 = vpack.c.b16 %v632, %v624
    %v881 = vpack.c.b16 %v633, %v625
    %v882 = vpack.c.b16 %v642, %v634
    %v883 = vpack.c.b16 %v643, %v635
    %v884 = vpack.c.b16 %v644, %v636
    %v885 = vpack.c.b16 %v645, %v637
    %v886 = vpack.c.b16 %v646, %v638
    %v887 = vpack.c.b16 %v647, %v639
    %v888 = vpack.c.b16 %v648, %v640
    %v889 = vpack.c.b16 %v649, %v641
    %v890 = vpack.c.b16 %v658, %v650
    %v891 = vpack.c.b16 %v659, %v651
    %v892 = vpack.c.b16 %v660, %v652
    %v893 = vpack.c.b16 %v661, %v653
    %v894 = vpack.c.b16 %v662, %v654
    %v895 = vpack.c.b16 %v663, %v655
    %v896 = vpack.c.b16 %v664, %v656
    %v897 = vpack.c.b16 %v665, %v657
    %v898 = vpack.c.b16 %v674, %v666
    %v899 = vpack.c.b16 %v675, %v667
    %v900 = vpack.c.b16 %v676, %v668
    %v901 = vpack.c.b16 %v677, %v669
    %v902 = vpack.c.b16 %v678, %v670
    %v903 = vpack.c.b16 %v679, %v671
    %v904 = vpack.c.b16 %v680, %v672
    %v905 = vpack.c.b16 %v681, %v673
    %v906 = vpack.c.b16 %v690, %v682
    %v907 = vpack.c.b16 %v691, %v683
    %v908 = vpack.c.b16 %v692, %v684
    %v909 = vpack.c.b16 %v693, %v685
    %v910 = vpack.c.b16 %v694, %v686
    %v911 = vpack.c.b16 %v695, %v687
    %v912 = vpack.c.b16 %v696, %v688
    %v913 = vpack.c.b16 %v697, %v689
    %v914 = vpack.c.b16 %v706, %v698
    %v915 = vpack.c.b16 %v707, %v699
    %v916 = vpack.c.b16 %v708, %v700
    %v917 = vpack.c.b16 %v709, %v701
    %v918 = vpack.c.b16 %v710, %v702
    %v919 = vpack.c.b16 %v711, %v703
    %v920 = vpack.c.b16 %v712, %v704
    %v921 = vpack.c.b16 %v713, %v705
    %v922 = vpack.c.b16 %v722, %v714
    %v923 = vpack.c.b16 %v723, %v715
    %v924 = vpack.c.b16 %v724, %v716
    %v925 = vpack.c.b16 %v725, %v717
    %v926 = vpack.c.b16 %v726, %v718
    %v927 = vpack.c.b16 %v727, %v719
    %v928 = vpack.c.b16 %v728, %v720
    %v929 = vpack.c.b16 %v729, %v721
    %v930 = vpack.c.b16 %v738, %v730
    %v931 = vpack.c.b16 %v739, %v731
    %v932 = vpack.c.b16 %v740, %v732
    %v933 = vpack.c.b16 %v741, %v733
    %v934 = vpack.c.b16 %v742, %v734
    %v935 = vpack.c.b16 %v743, %v735
    %v936 = vpack.c.b16 %v744, %v736
    %v937 = vpack.c.b16 %v745, %v737
    %v938 = vpack.c.b16 %v754, %v746
    %v939 = vpack.c.b16 %v755, %v747
    %v940 = vpack.c.b16 %v756, %v748
    %v941 = vpack.c.b16 %v757, %v749
    %v942 = vpack.c.b16 %v758, %v750
    %v943 = vpack.c.b16 %v759, %v751
    %v944 = vpack.c.b16 %v760, %v752
    %v945 = vpack.c.b16 %v761, %v753
    %v946 = vpack.c.b16 %v770, %v762
    %v947 = vpack.c.b16 %v771, %v763
    %v948 = vpack.c.b16 %v772, %v764
    %v949 = vpack.c.b16 %v773, %v765
    %v950 = vpack.c.b16 %v774, %v766
    %v951 = vpack.c.b16 %v775, %v767
    %v952 = vpack.c.b16 %v776, %v768
    %v953 = vpack.c.b16 %v777, %v769
    %v954 = vpack.c.b16 %v786, %v778
    %v955 = vpack.c.b16 %v787, %v779
    %v956 = vpack.c.b16 %v788, %v780
    %v957 = vpack.c.b16 %v789, %v781
    %v958 = vpack.c.b16 %v790, %v782
    %v959 = vpack.c.b16 %v791, %v783
    %v960 = vpack.c.b16 %v792, %v784
    %v961 = vpack.c.b16 %v793, %v785
    %v962 = vpack.c.b16 %v802, %v794
    %v963 = vpack.c.b16 %v803, %v795
    %v964 = vpack.c.b16 %v804, %v796
    %v965 = vpack.c.b16 %v805, %v797
    %v966 = vpack.c.b16 %v806, %v798
    %v967 = vpack.c.b16 %v807, %v799
    %v968 = vpack.c.b16 %v808, %v800
    %v969 = vpack.c.b16 %v809, %v801
    %v970 = vpack.c.b16 %v818, %v810
    %v971 = vpack.c.b16 %v819, %v811
    %v972 = vpack.c.b16 %v820, %v812
    %v973 = vpack.c.b16 %v821, %v813
    %v974 = vpack.c.b16 %v822, %v814
    %v975 = vpack.c.b16 %v823, %v815
    %v976 = vpack.c.b16 %v824, %v816
    %v977 = vpack.c.b16 %v825, %v817
    %v978 = vpack.c.b16 %v834, %v826
    %v979 = vpack.c.b16 %v835, %v827
    %v980 = vpack.c.b16 %v836, %v828
    %v981 = vpack.c.b16 %v837, %v829
    %v982 = vpack.c.b16 %v838, %v830
    %v983 = vpack.c.b16 %v839, %v831
    %v984 = vpack.c.b16 %v840, %v832
    %v985 = vpack.c.b16 %v841, %v833
    %v986 = vpack.c.b16 %v850, %v842
    %v987 = vpack.c.b16 %v851, %v843
    %v988 = vpack.c.b16 %v852, %v844
    %v989 = vpack.c.b16 %v853, %v845
    %v990 = vpack.c.b16 %v854, %v846
    %v991 = vpack.c.b16 %v855, %v847
    %v992 = vpack.c.b16 %v856, %v848
    %v993 = vpack.c.b16 %v857, %v849
    %v994 = vpack.c.b16 %v866, %v858
    %v995 = vpack.c.b16 %v867, %v859
    %v996 = vpack.c.b16 %v868, %v860
    %v997 = vpack.c.b16 %v869, %v861
    %v998 = vpack.c.b16 %v870, %v862
    %v999 = vpack.c.b16 %v871, %v863
    %v1000 = vpack.c.b16 %v872, %v864
    %v1001 = vpack.c.b16 %v873, %v865
    %1130 = vmatprep.subr.bf16.mxu0 %v875
    %1131 = vmatpush1.bf16.msra.mxu0 %v874
    %1132 = vmatprep.subr.bf16.mxu0 %v883
    %1133 = vmatpush1.bf16.msra.mxu0 %v882
    %1134 = vmatprep.subr.bf16.mxu0 %v891
    %1135 = vmatpush1.bf16.msra.mxu0 %v890
    %1136 = vmatprep.subr.bf16.mxu0 %v899
    %1137 = vmatpush1.bf16.msra.mxu0 %v898
    %1138 = vmatprep.subr.bf16.mxu0 %v907
    %1139 = vmatpush1.bf16.msra.mxu0 %v906
    %1140 = vmatprep.subr.bf16.mxu0 %v915
    %1141 = vmatpush1.bf16.msra.mxu0 %v914
    %1142 = vmatprep.subr.bf16.mxu0 %v923
    %1143 = vmatpush1.bf16.msra.mxu0 %v922
    %1144 = vmatprep.subr.bf16.mxu0 %v931
    %1145 = vmatpush1.bf16.msra.mxu0 %v930
    %1146 = vmatprep.subr.bf16.mxu0 %v939
    %1147 = vmatpush1.bf16.msra.mxu0 %v938
    %1148 = vmatprep.subr.bf16.mxu0 %v947
    %1149 = vmatpush1.bf16.msra.mxu0 %v946
    %1150 = vmatprep.subr.bf16.mxu0 %v955
    %1151 = vmatpush1.bf16.msra.mxu0 %v954
    %1152 = vmatprep.subr.bf16.mxu0 %v963
    %1153 = vmatpush1.bf16.msra.mxu0 %v962
    %1154 = vmatprep.subr.bf16.mxu0 %v971
    %1155 = vmatpush1.bf16.msra.mxu0 %v970
    %1156 = vmatprep.subr.bf16.mxu0 %v979
    %1157 = vmatpush1.bf16.msra.mxu0 %v978
    %1158 = vmatprep.subr.bf16.mxu0 %v987
    %1159 = vmatpush1.bf16.msra.mxu0 %v986
    %1160 = vmatprep.subr.bf16.mxu0 %v995
    %1161 = vmatpush1.bf16.msra.mxu0 %v994
    %1162 = vmatprep.mubr.bf16.mxu0 %v319
    %1163 = vmatmul.mubr.bf16.gmra.mrb[0].mxu0 %v318
    %v1164 = vpop.f32.mrb[0].mxu0
    %v1165 = vadd.f32 %v453, %v1164
    %v1166 = vpop.f32.mrb[0].mxu0
    %v1167 = vadd.f32 %v457, %v1166
    %v1168 = vpop.f32.mrb[0].mxu0
    %v1169 = vadd.f32 %v453, %v1168
    %v1170 = vpop.f32.mrb[0].mxu0
    %v1171 = vadd.f32 %v457, %v1170
    %1172 = vdwg.mxu0
    %1173 = vmatprep.subr.bf16.mxu0 %v877
    %1174 = vmatpush1.bf16.msra.mxu0 %v876
    %1175 = vmatprep.subr.bf16.mxu0 %v885
    %1176 = vmatpush1.bf16.msra.mxu0 %v884
    %1177 = vmatprep.subr.bf16.mxu0 %v893
    %1178 = vmatpush1.bf16.msra.mxu0 %v892
    %1179 = vmatprep.subr.bf16.mxu0 %v901
    %1180 = vmatpush1.bf16.msra.mxu0 %v900
    %1181 = vmatprep.subr.bf16.mxu0 %v909
    %1182 = vmatpush1.bf16.msra.mxu0 %v908
    %1183 = vmatprep.subr.bf16.mxu0 %v917
    %1184 = vmatpush1.bf16.msra.mxu0 %v916
    %1185 = vmatprep.subr.bf16.mxu0 %v925
    %1186 = vmatpush1.bf16.msra.mxu0 %v924
    %1187 = vmatprep.subr.bf16.mxu0 %v933
    %1188 = vmatpush1.bf16.msra.mxu0 %v932
    %1189 = vmatprep.subr.bf16.mxu0 %v941
    %1190 = vmatpush1.bf16.msra.mxu0 %v940
    %1191 = vmatprep.subr.bf16.mxu0 %v949
    %1192 = vmatpush1.bf16.msra.mxu0 %v948
    %1193 = vmatprep.subr.bf16.mxu0 %v957
    %1194 = vmatpush1.bf16.msra.mxu0 %v956
    %1195 = vmatprep.subr.bf16.mxu0 %v965
    %1196 = vmatpush1.bf16.msra.mxu0 %v964
    %1197 = vmatprep.subr.bf16.mxu0 %v973
    %1198 = vmatpush1.bf16.msra.mxu0 %v972
    %1199 = vmatprep.subr.bf16.mxu0 %v981
    %1200 = vmatpush1.bf16.msra.mxu0 %v980
    %1201 = vmatprep.subr.bf16.mxu0 %v989
    %1202 = vmatpush1.bf16.msra.mxu0 %v988
    %1203 = vmatprep.subr.bf16.mxu0 %v997
    %1204 = vmatpush1.bf16.msra.mxu0 %v996
    %1205 = vmatprep.mubr.bf16.mxu0 %v319
    %1206 = vmatmul.mubr.bf16.gmra.mrb[0].mxu0 %v318
    %v1207 = vpop.f32.mrb[0].mxu0
    %v1208 = vadd.f32 %v461, %v1207
    %v1209 = vpop.f32.mrb[0].mxu0
    %v1210 = vadd.f32 %v465, %v1209
    %v1211 = vpop.f32.mrb[0].mxu0
    %v1212 = vadd.f32 %v461, %v1211
    %v1213 = vpop.f32.mrb[0].mxu0
    %v1214 = vadd.f32 %v465, %v1213
    %1215 = vdwg.mxu0
    %1216 = vmatprep.subr.bf16.mxu0 %v879
    %1217 = vmatpush1.bf16.msra.mxu0 %v878
    %1218 = vmatprep.subr.bf16.mxu0 %v887
    %1219 = vmatpush1.bf16.msra.mxu0 %v886
    %1220 = vmatprep.subr.bf16.mxu0 %v895
    %1221 = vmatpush1.bf16.msra.mxu0 %v894
    %1222 = vmatprep.subr.bf16.mxu0 %v903
    %1223 = vmatpush1.bf16.msra.mxu0 %v902
    %1224 = vmatprep.subr.bf16.mxu0 %v911
    %1225 = vmatpush1.bf16.msra.mxu0 %v910
    %1226 = vmatprep.subr.bf16.mxu0 %v919
    %1227 = vmatpush1.bf16.msra.mxu0 %v918
    %1228 = vmatprep.subr.bf16.mxu0 %v927
    %1229 = vmatpush1.bf16.msra.mxu0 %v926
    %1230 = vmatprep.subr.bf16.mxu0 %v935
    %1231 = vmatpush1.bf16.msra.mxu0 %v934
    %1232 = vmatprep.subr.bf16.mxu0 %v943
    %1233 = vmatpush1.bf16.msra.mxu0 %v942
    %1234 = vmatprep.subr.bf16.mxu0 %v951
    %1235 = vmatpush1.bf16.msra.mxu0 %v950
    %1236 = vmatprep.subr.bf16.mxu0 %v959
    %1237 = vmatpush1.bf16.msra.mxu0 %v958
    %1238 = vmatprep.subr.bf16.mxu0 %v967
    %1239 = vmatpush1.bf16.msra.mxu0 %v966
    %1240 = vmatprep.subr.bf16.mxu0 %v975
    %1241 = vmatpush1.bf16.msra.mxu0 %v974
    %1242 = vmatprep.subr.bf16.mxu0 %v983
    %1243 = vmatpush1.bf16.msra.mxu0 %v982
    %1244 = vmatprep.subr.bf16.mxu0 %v991
    %1245 = vmatpush1.bf16.msra.mxu0 %v990
    %1246 = vmatprep.subr.bf16.mxu0 %v999
    %1247 = vmatpush1.bf16.msra.mxu0 %v998
    %1248 = vmatprep.mubr.bf16.mxu0 %v319
    %1249 = vmatmul.mubr.bf16.gmra.mrb[0].mxu0 %v318
    %v1250 = vpop.f32.mrb[0].mxu0
    %v1251 = vadd.f32 %v469, %v1250
    %v1252 = vpop.f32.mrb[0].mxu0
    %v1253 = vadd.f32 %v473, %v1252
    %v1254 = vpop.f32.mrb[0].mxu0
    %v1255 = vadd.f32 %v469, %v1254
    %v1256 = vpop.f32.mrb[0].mxu0
    %v1257 = vadd.f32 %v473, %v1256
    %1258 = vdwg.mxu0
    %1259 = vmatprep.subr.bf16.mxu0 %v881
    %1260 = vmatpush1.bf16.msra.mxu0 %v880
    %1261 = vmatprep.subr.bf16.mxu0 %v889
    %1262 = vmatpush1.bf16.msra.mxu0 %v888
    %1263 = vmatprep.subr.bf16.mxu0 %v897
    %1264 = vmatpush1.bf16.msra.mxu0 %v896
    %1265 = vmatprep.subr.bf16.mxu0 %v905
    %1266 = vmatpush1.bf16.msra.mxu0 %v904
    %1267 = vmatprep.subr.bf16.mxu0 %v913
    %1268 = vmatpush1.bf16.msra.mxu0 %v912
    %1269 = vmatprep.subr.bf16.mxu0 %v921
    %1270 = vmatpush1.bf16.msra.mxu0 %v920
    %1271 = vmatprep.subr.bf16.mxu0 %v929
    %1272 = vmatpush1.bf16.msra.mxu0 %v928
    %1273 = vmatprep.subr.bf16.mxu0 %v937
    %1274 = vmatpush1.bf16.msra.mxu0 %v936
    %1275 = vmatprep.subr.bf16.mxu0 %v945
    %1276 = vmatpush1.bf16.msra.mxu0 %v944
    %1277 = vmatprep.subr.bf16.mxu0 %v953
    %1278 = vmatpush1.bf16.msra.mxu0 %v952
    %1279 = vmatprep.subr.bf16.mxu0 %v961
    %1280 = vmatpush1.bf16.msra.mxu0 %v960
    %1281 = vmatprep.subr.bf16.mxu0 %v969
    %1282 = vmatpush1.bf16.msra.mxu0 %v968
    %1283 = vmatprep.subr.bf16.mxu0 %v977
    %1284 = vmatpush1.bf16.msra.mxu0 %v976
    %1285 = vmatprep.subr.bf16.mxu0 %v985
    %1286 = vmatpush1.bf16.msra.mxu0 %v984
    %1287 = vmatprep.subr.bf16.mxu0 %v993
    %1288 = vmatpush1.bf16.msra.mxu0 %v992
    %1289 = vmatprep.subr.bf16.mxu0 %v1001
    %1290 = vmatpush1.bf16.msra.mxu0 %v1000
    %1291 = vmatprep.mubr.bf16.mxu0 %v319
    %1292 = vmatmul.mubr.bf16.gmra.mrb[0].mxu0 %v318
    %v1293 = vpop.f32.mrb[0].mxu0
    %v1294 = vadd.f32 %v477, %v1293
    %v1295 = vpop.f32.mrb[0].mxu0
    %v1296 = vadd.f32 %v481, %v1295
    %v1297 = vpop.f32.mrb[0].mxu0
    %v1298 = vadd.f32 %v477, %v1297
    %v1299 = vpop.f32.mrb[0].mxu0
    %v1300 = vadd.f32 %v481, %v1299
    %1301 = vdwg.mxu0
    %1302 = vst [vmem:[#allocation8] sm:$0xff] %v1165
    %1303 = vst [vmem:[#allocation8 + $0x8] sm:$0xff] %v1167
    %1304 = vst [vmem:[#allocation8 + $0x10] sm:$0xff] %v1208
    %1305 = vst [vmem:[#allocation8 + $0x18] sm:$0xff] %v1210
    %1306 = vst [vmem:[#allocation8 + $0x20] sm:$0xff] %v1251
    %1307 = vst [vmem:[#allocation8 + $0x28] sm:$0xff] %v1253
    %1308 = vst [vmem:[#allocation8 + $0x30] sm:$0xff] %v1294
    %1309 = vst [vmem:[#allocation8 + $0x38] sm:$0xff] %v1296
    %1310 = vst [vmem:[#allocation8 + $0x40] sm:$0xff] %v1169
    %1311 = vst [vmem:[#allocation8 + $0x48] sm:$0xff] %v1171
    %1312 = vst [vmem:[#allocation8 + $0x50] sm:$0xff] %v1212
    %1313 = vst [vmem:[#allocation8 + $0x58] sm:$0xff] %v1214
    %1314 = vst [vmem:[#allocation8 + $0x60] sm:$0xff] %v1255
    %1315 = vst [vmem:[#allocation8 + $0x68] sm:$0xff] %v1257
    %1316 = vst [vmem:[#allocation8 + $0x70] sm:$0xff] %v1298
    %1317 = vst [vmem:[#allocation8 + $0x78] sm:$0xff] %v1300
    // Predicated region
    $region34: #{_linear_classifier_fwd.1} parent=1 // pred_check
      _
    $region35: #{_linear_classifier_fwd.1} parent=1 // pred_check_branch
      %1319 = sbr.rel (0) target = $region37
    $region36: #{_linear_classifier_fwd.1} parent=1 // pred_region
      %s1321 = ssub.s32 2048, 2048
      %1322 = vsyncadd [#allocation5], %s1321
      %s1323 = sshll.u32 [#allocation8], 4
      %s1324 = int_to_ptr.vmem [resolvable:$true] %s1323
      %1329 = dma.vmem_to_hbm [thread:$0]  %s1324, 2048, %s5, [#allocation5], 1024, 1024, 64
    $region37: #{_linear_classifier_fwd.1} parent=1 // pred_fallthru
      _
    // Predicated region
    $region38: #{_linear_classifier_fwd.1} parent=1 // pred_check
      _
    $region39: #{_linear_classifier_fwd.1} parent=1 // pred_check_branch
      %1331 = sbr.rel (0) target = $region41
    $region40: #{_linear_classifier_fwd.1} parent=1 // pred_region
      %1332 = dma.done [#allocation5], 2048
    $region41: #{_linear_classifier_fwd.1} parent=1 // pred_fallthru
      _
    %1333 = vsyncpa [#allocation4], 1
    %1334 = vsyncpa [#allocation7], 1
    %1335 = vsyncpa [#allocation5], 1

</llo_original>
